<compile_context>
chip_gen: v5e
topology: v5e:2x2
jax: 0.10.0
libtpu: 0.0.40
codegen_flags: <defaults>
</compile_context>

<pallas_src>
import jax
import jax.numpy as jnp
from jax.experimental import pallas as pl
from jax.experimental.pallas import tpu as pltpu


_EPS = 1e-12  # matches torch.nn.functional.normalize default eps


def _cdiv(a: int, b: int) -> int:
    return -(-a // b)


def _round_up(a: int, b: int) -> int:
    return _cdiv(a, b) * b


def _balanced_tile(n: int, target: int, align: int) -> int:
    """Tile size: multiple of `align`, ~<= target, minimizing padding waste of n."""
    n_al = _round_up(max(n, 1), align)
    target = max(align, min(_round_up(target, align), n_al))
    num_tiles = _cdiv(n_al, target)
    return _round_up(_cdiv(n, num_tiles), align)


def _cosine_linear_kernel(x_ref, w_ref, o_ref, xn_ref):
    # x_ref:  (TM, D)   input batch tile, bf16
    # w_ref:  (D, TN)   pre-normalized, sigma-folded weight tile, bf16 (stored layout)
    # o_ref:  (TM, TN)  output tile
    # xn_ref: (TM, D)   VMEM scratch — normalized bf16 rows, cached across j
    @pl.when(pl.program_id(1) == 0)
    def _():
        # Row-wise L2 normalize in f32: x * rsqrt(max(sumsq, eps^2)) == x / max(||x||, eps).
        x = x_ref[...].astype(jnp.float32)
        sumsq = jnp.sum(x * x, axis=-1, keepdims=True)              # XLU reduce
        inv_norm = jax.lax.rsqrt(
            jnp.maximum(sumsq, jnp.float32(_EPS * _EPS)))           # EUP
        xn_ref[...] = (x * inv_norm).astype(jnp.bfloat16)

    # MXU matmul: bf16 operands, f32 accumulation, contraction on D, no transpose.
    o_ref[...] = jnp.dot(
        xn_ref[...], w_ref[...], preferred_element_type=jnp.float32
    ).astype(o_ref.dtype)


def prepare_cosine_weight(weight, sigma):
    """One-time (per weight update) prep: L2-normalize W rows in f32, fold sigma,
    transpose to (D, O) stored layout, cast to bf16. Hoist this out of the
    per-forward path and cache the result."""
    w32 = weight.astype(jnp.float32)
    inv = jax.lax.rsqrt(
        jnp.maximum(jnp.sum(w32 * w32, axis=1, keepdims=True),
                    jnp.float32(_EPS * _EPS)))
    scale = inv * sigma.reshape(()).astype(jnp.float32)
    return (w32 * scale).T.astype(jnp.bfloat16)  # (D, O)


def cosine_linear_apply(x, wn_t, *, tile_m=1024, tile_n=512, out_dtype=jnp.float32):
    """out[:B, :O] = normalize(x, dim=1) @ wn_t  (wn_t already sigma * normalize(W).T)."""
    B, D = x.shape
    Dw, O = wn_t.shape
    assert D == Dw, "in_features mismatch"

    # ---- generation-aware VMEM budget -------------------------------------
    try:
        vmem_cap = int(pltpu.get_tpu_info().vmem_capacity_bytes)
    except Exception:  # pragma: no cover - conservative fallback
        vmem_cap = 64 << 20
    vmem_budget = (vmem_cap * 3) // 4   # ~96 MiB v5e/v6e, ~48 MiB v7x

    out_itemsize = jnp.dtype(out_dtype).itemsize

    def footprint(tm, tn):
        return (2 * tm * D * 2               # x tile (bf16), double-buffered
                + 2 * D * tn * 2             # W tile (bf16), double-buffered
                + 2 * tm * tn * out_itemsize  # out tile, double-buffered
                + tm * D * 2                 # xn scratch (bf16)
                + tm * D * 4                 # f32 upcast temp at j == 0
                + (2 << 20))                 # misc internal scratch headroom

    # ---- balanced tile selection; shrink tiles (not the limit) if needed ---
    tgt_m, tgt_n = tile_m, tile_n
    tm = _balanced_tile(B, tgt_m, 8)
    tn = _balanced_tile(O, tgt_n, 128)
    while footprint(tm, tn) > vmem_budget:
        if tgt_n > 128:
            tgt_n //= 2          # does not change total W HBM traffic
        elif tgt_m > 8:
            tgt_m //= 2
        else:
            # TODO(synk): add a K (feature) grid axis with an f32 accumulator
            # for D too large to hold a full row block in VMEM.
            break
        tm = _balanced_tile(B, tgt_m, 8)
        tn = _balanced_tile(O, tgt_n, 128)

    B_pad = _round_up(B, tm)
    O_pad = _round_up(O, tn)

    # v7x megacore: a (1, 1) grid runs on one TensorCore; split the batch when
    # possible so the "parallel" i axis covers both cores.
    if B_pad // tm == 1 and O_pad // tn == 1 and B >= 16:
        tm = _balanced_tile(B, _round_up(_cdiv(B, 2), 8), 8)
        B_pad = _round_up(B, tm)

    # bf16 x, fused with padding (zero rows normalize to 0 — no NaN, sliced off).
    x_p = x.astype(jnp.bfloat16)
    if B_pad != B:
        x_p = jnp.pad(x_p, ((0, B_pad - B), (0, 0)))
    w_p = wn_t if O_pad == O else jnp.pad(wn_t, ((0, 0), (0, O_pad - O)))

    grid = (B_pad // tm, O_pad // tn)
    vmem_limit = int(min(max(vmem_budget, footprint(tm, tn) + (4 << 20)),
                         vmem_cap - (4 << 20)))

    # NOTE: (i outer / j inner) keeps the x tile + cached xn resident per i and
    # streams W. For huge-B / modest D*O workloads swapping axes (W resident,
    # x streamed) would lower HBM traffic, but it forfeits the xn cache.
    out = pl.pallas_call(
        _cosine_linear_kernel,
        out_shape=jax.ShapeDtypeStruct((B_pad, O_pad), out_dtype),
        grid_spec=pltpu.PrefetchScalarGridSpec(
            num_scalar_prefetch=0,
            grid=grid,
            in_specs=[
                # x: tile over batch, full feature row (normalization needs it).
                pl.BlockSpec((tm, D), lambda i, j: (i, 0)),
                # W^T (pre-normalized, sigma-folded, bf16): tile over output cols.
                pl.BlockSpec((D, tn), lambda i, j: (0, j)),
            ],
            out_specs=pl.BlockSpec((tm, tn), lambda i, j: (i, j)),
            scratch_shapes=[pltpu.VMEM((tm, D), jnp.bfloat16)],
        ),
        compiler_params=pltpu.CompilerParams(
            # i parallel (megacore sharding); j arbitrary (carries the xn scratch).
            dimension_semantics=("parallel", "arbitrary"),
            vmem_limit_bytes=vmem_limit,
        ),
    )(x_p, w_p)

    return out[:B, :O]


def cosine_linear(x, weight, sigma, **kwargs):
    """Full CosineLinear.forward (use_RP=False path). Prefer calling
    prepare_cosine_weight once per weight update and cosine_linear_apply per step."""
    wn_t = prepare_cosine_weight(weight, sigma)
    return {"logits": cosine_linear_apply(x, wn_t, **kwargs)}


if __name__ == "__main__":
    # Small shapes consistent with the module: batch=8, in_features=32, out_features=16.
    B, IN_F, OUT_F = 8, 32, 16

    key = jax.random.PRNGKey(0)
    kx, kw = jax.random.split(key)

    # Deterministic parameter init mirroring reset_parameters():
    #   weight ~ U(-stdv, stdv), stdv = 1/sqrt(in_features); sigma = 1.0
    stdv = 1.0 / (IN_F ** 0.5)
    weight = jax.random.uniform(
        kw, (OUT_F, IN_F), dtype=jnp.float32, minval=-stdv, maxval=stdv
    )
    sigma = jnp.ones((1,), dtype=jnp.float32)

    x = jax.random.normal(kx, (B, IN_F), dtype=jnp.float32)

    result = cosine_linear(x, weight, sigma)
    logits = jax.block_until_ready(result["logits"])

    # Pure-JAX f32 reference (kernel uses bf16 MXU operands -> looser tolerance).
    def _ref(x, w, s):
        eps = 1e-12
        xn = x / jnp.maximum(jnp.linalg.norm(x, axis=1, keepdims=True), eps)
        wn = w / jnp.maximum(jnp.linalg.norm(w, axis=1, keepdims=True), eps)
        return s[0] * (xn @ wn.T)

    ref = _ref(x, weight, sigma)
    assert logits.shape == (B, OUT_F)
    assert jnp.allclose(logits, ref, atol=2e-2, rtol=2e-2), "mismatch vs reference"

    # TODO(synk): use_RP=True branch (ReLU(x @ W_rand) then plain linear) is a
    # runtime-configured mode not active after __init__; only the default cosine
    # path is implemented here.

    print("KERNEL_OK")
</pallas_src>

<mosaic_0001>
module attributes {stable_mosaic.version = 11 : i64} {
  func.func @_cosine_linear_kernel(%arg0: i32, %arg1: i32, %arg2: memref<8x32xbf16, #tpu.memory_space<vmem>>, %arg3: memref<32x128xbf16, #tpu.memory_space<vmem>>, %arg4: memref<8x128xf32, #tpu.memory_space<vmem>>, %arg5: memref<8x32xbf16, #tpu.memory_space<vmem>>) attributes {dimension_semantics = [#tpu.dimension_semantics<parallel>, #tpu.dimension_semantics<arbitrary>], iteration_bounds = array<i64: 1, 1>, scalar_prefetch = 0 : i64, scratch_operands = 1 : i64, tpu.core_type = #tpu.core_type<tc>, window_params = [{transform_indices = @transform_0, window_bounds = array<i64: 8, 32>}, {transform_indices = @transform_1, window_bounds = array<i64: 32, 128>}, {transform_indices = @transform_2, window_bounds = array<i64: 8, 128>}]} {
    %c0_i32 = arith.constant 0 : i32
    %0 = arith.cmpi eq, %arg1, %c0_i32 : i32
    %1 = arith.extui %0 : i1 to i32
    %c0_i32_0 = arith.constant 0 : i32
    %2 = arith.cmpi ne, %1, %c0_i32_0 : i32
    scf.if %2 {
      %c0_6 = arith.constant 0 : index
      %c0_7 = arith.constant 0 : index
      %7 = vector.load %arg2[%c0_6, %c0_7] : memref<8x32xbf16, #tpu.memory_space<vmem>>, vector<8x32xbf16>
      %8 = arith.extf %7 : vector<8x32xbf16> to vector<8x32xf32>
      %9 = arith.mulf %8, %8 : vector<8x32xf32>
      %cst_8 = arith.constant dense<0.000000e+00> : vector<8xf32>
      %10 = vector.multi_reduction <add>, %9, %cst_8 [1] : vector<8x32xf32> to vector<8xf32>
      %11 = vector.shape_cast %10 : vector<8xf32> to vector<8x1xf32>
      %cst_9 = arith.constant 1.000000e-24 : f32
      %12 = vector.broadcast %cst_9 : f32 to vector<8x1xf32>
      %13 = arith.maximumf %11, %12 : vector<8x1xf32>
      %14 = math.rsqrt %13 : vector<8x1xf32>
      %15 = vector.broadcast %14 : vector<8x1xf32> to vector<8x32xf32>
      %16 = arith.mulf %8, %15 : vector<8x32xf32>
      %17 = arith.truncf %16 : vector<8x32xf32> to vector<8x32xbf16>
      %c0_10 = arith.constant 0 : index
      %c0_11 = arith.constant 0 : index
      %18 = vector.load %arg5[%c0_10, %c0_11] : memref<8x32xbf16, #tpu.memory_space<vmem>>, vector<8x32xbf16>
      tpu.vector_store %arg5[%c0_10, %c0_11], %17 {strides = array<i32>} : memref<8x32xbf16, #tpu.memory_space<vmem>>, vector<8x32xbf16>,
    } else {
    }
    %c0 = arith.constant 0 : index
    %c0_1 = arith.constant 0 : index
    %3 = vector.load %arg5[%c0, %c0_1] : memref<8x32xbf16, #tpu.memory_space<vmem>>, vector<8x32xbf16>
    %c0_2 = arith.constant 0 : index
    %c0_3 = arith.constant 0 : index
    %4 = vector.load %arg3[%c0_2, %c0_3] : memref<32x128xbf16, #tpu.memory_space<vmem>>, vector<32x128xbf16>
    %cst = arith.constant dense<0.000000e+00> : vector<8x128xf32>
    %5 = tpu.matmul %3, %4, %cst {dimension_numbers = #tpu.dot_dimension_numbers<[1], [0], [0], [1], [0, 0, 1, 1], [], []>} : vector<8x32xbf16>, vector<32x128xbf16>, vector<8x128xf32> -> vector<8x128xf32>
    %c0_4 = arith.constant 0 : index
    %c0_5 = arith.constant 0 : index
    %6 = vector.load %arg4[%c0_4, %c0_5] : memref<8x128xf32, #tpu.memory_space<vmem>>, vector<8x128xf32>
    tpu.vector_store %arg4[%c0_4, %c0_5], %5 {strides = array<i32>} : memref<8x128xf32, #tpu.memory_space<vmem>>, vector<8x128xf32>,
    return
  }
  func.func @transform_0(%arg0: i32, %arg1: i32) -> (i32, i32) {
    %c0_i32 = arith.constant 0 : i32
    %c0_i32_0 = arith.constant 0 : i32
    return %arg0, %c0_i32 : i32, i32
  }
  func.func @transform_1(%arg0: i32, %arg1: i32) -> (i32, i32) {
    %c0_i32 = arith.constant 0 : i32
    %c0_i32_0 = arith.constant 0 : i32
    return %c0_i32, %arg1 : i32, i32
  }
  func.func @transform_2(%arg0: i32, %arg1: i32) -> (i32, i32) {
    %c0_i32 = arith.constant 0 : i32
    return %arg0, %arg1 : i32, i32
  }
}

</mosaic_0001>

<llo_original>
// kernel: tpu_custom_call.1
$region0: #{tpu_custom_call.1}
  #allocation0 [shape = 'u32[]', space=smem, size = 0x4, offset = 0x4, fixed_abs, tag = 'smem constant byte address 0x4 - core index']
  #allocation1 [shape = 'u32[72,128]{1,0:T(1,128)}', space=vmem, size = 0x9000, scoped, tag = 'internal scratch']
  #allocation2 [shape = 'bf16[8,32]{1,0:T(8,128)(2,1)}', space=vmem, size = 0x800, scoped, tag = 'scratch operand']
  %s0 = inlined_call_operand.hbm [shape: bf16[8,32], index: 0, kind: input, shape index: {}]
  %s1 = inlined_call_operand.hbm [shape: bf16[32,128], index: 1, kind: input, shape index: {}]
  %s2 = inlined_call_operand.hbm [shape: f32[8,128], index: 2, kind: output, shape index: {}]
  %s3 = sld [smem:[#allocation0]]
  $region30: #{tpu_custom_call.1} parent=0
    _
  %s5 = ssub.s32 1, %s3
  %s6 = scalar_select 0, %s5, %s3
  $region1: #{tpu_custom_call.1} parent=0
    #allocation3 [shape = 'u8[2048]{0}', space=vmem, size = 0x800, scoped, tag = 'input window, operand 0, single buffered']
    #allocation4 [shape = 's32[1]{0}', space=sflag, size = 0x4, scoped, tag = 'scoped memory for tpu_custom_call.1']
    #allocation5 [shape = 's32[1]{0}', space=sflag, size = 0x4, scoped, tag = 'scoped memory for tpu_custom_call.1']
    #allocation6 [shape = 'u8[8192]{0}', space=vmem, size = 0x2000, scoped, tag = 'input window, operand 1, single buffered']
    #allocation7 [shape = 's32[1]{0}', space=sflag, size = 0x4, scoped, tag = 'scoped memory for tpu_custom_call.1']
    #allocation8 [shape = 'u8[4096]{0}', space=vmem, size = 0x1000, scoped, tag = 'output window, operand 0, single buffered']
    %7 = vsyncpa [#allocation4], 0
    %8 = vsyncpa [#allocation7], 0
    %9 = vsyncpa [#allocation5], 0
    // Predicated region
    $region2: #{tpu_custom_call.1} parent=1 // pred_check
      _
    $region3: #{tpu_custom_call.1} parent=1 // pred_check_branch
      %11 = sbr.rel (0) target = $region5
    $region4: #{tpu_custom_call.1} parent=1 // pred_region
      %13 = vsyncadd [#allocation4], 0
      %s15 = sshll.u32 %s0, 4
      %s16 = int_to_ptr.hbm [resolvable:$true] %s15
      %s17 = sshll.u32 [#allocation3], 4
      %s18 = int_to_ptr.vmem [resolvable:$true] %s17
      %20 = dma.hbm_to_vmem [thread:$0]  %s16, 64, %s18, [#allocation4]
    $region5: #{tpu_custom_call.1} parent=1 // pred_fallthru
      _
    // Predicated region
    $region6: #{tpu_custom_call.1} parent=1 // pred_check
      _
    $region7: #{tpu_custom_call.1} parent=1 // pred_check_branch
      %22 = sbr.rel (0) target = $region9
    $region8: #{tpu_custom_call.1} parent=1 // pred_region
      %24 = vsyncadd [#allocation7], 0
      %s25 = sshll.u32 %s1, 4
      %s26 = int_to_ptr.hbm [resolvable:$true] %s25
      %s27 = sshll.u32 [#allocation6], 4
      %s28 = int_to_ptr.vmem [resolvable:$true] %s27
      %33 = dma.hbm_to_vmem [thread:$0]  %s26, 256, %s28, [#allocation7], 64, 64, 4
    $region9: #{tpu_custom_call.1} parent=1 // pred_fallthru
      _
    // Predicated region
    $region10: #{tpu_custom_call.1} parent=1 // pred_check
      _
    $region11: #{tpu_custom_call.1} parent=1 // pred_check_branch
      %35 = sbr.rel (0) target = $region13
    $region12: #{tpu_custom_call.1} parent=1 // pred_region
      %37 = dma.done [#allocation4], 64
    $region13: #{tpu_custom_call.1} parent=1 // pred_fallthru
      _
    // Predicated region
    $region14: #{tpu_custom_call.1} parent=1 // pred_check
      _
    $region15: #{tpu_custom_call.1} parent=1 // pred_check_branch
      %39 = sbr.rel (0) target = $region17
    $region16: #{tpu_custom_call.1} parent=1 // pred_region
      %41 = dma.done [#allocation7], 256
    $region17: #{tpu_custom_call.1} parent=1 // pred_fallthru
      _
    %p43 = scmp.eq.s32.totalorder 0, 0
    // Predicated region
    $region18: #{tpu_custom_call.1} parent=1 // pred_check
      %p44 = pneg %p43
    $region19: #{tpu_custom_call.1} parent=1 // pred_check_branch
      %46 = sbr.rel (%p44) target = $region21
    $region20: #{tpu_custom_call.1} parent=1 // pred_region
      %v47 = vld [vmem:[#allocation3] sm:$0xf]
      %v48 = vunpack.c.l.bf16 %v47
      %v49 = vmul.f32 %v48, %v48
      %vm50 = vcmask 261120
      %v51 = vsel %vm50, %v49, 0.0
      %52 = vadd.xlane.f32.xlu0 %v51
      %v53 = vpop.xlane.xlu0 %52
      %v54 = vmax.f32 %v53, 1e-24
      %v55 = vrsqrt.pop %v54
      %v56 = vmul.f32 %v55, %v54
      %v57 = vmul.f32 %v56, %v55
      %v58 = vmul.f32 0.5, %v57
      %v59 = vsub.f32 1.5, %v58
      %v60 = vmul.f32 %v55, %v59
      %vm61 = vweird.f32 %v54
      %vm62 = vweird.f32 %v55
      %vm63 = vmor %vm61, %vm62
      %v64 = vsel %vm63, %v55, %v60
      %v65 = vmul.f32 %v48, %v64
      %v66 = vpack.c.bf16 %v65, %v65
      %vm67 = vcmask 257024
      %68 = vst.msk [vmem:[#allocation2] sm:$0xf] %vm67, %v66
    $region21: #{tpu_custom_call.1} parent=1 // pred_fallthru
      _
    %v69 = vld [vmem:[#allocation2] sm:$0xf]
    %v70 = vld [vmem:[#allocation6] sm:$0xf]
    %v71 = vld [vmem:[#allocation6 + $0x4] sm:$0xf]
    %v72 = vld [vmem:[#allocation6 + $0x8] sm:$0xf]
    %v73 = vld [vmem:[#allocation6 + $0xc] sm:$0xf]
    %v78 = vunpack.c.l.b16 %v70
    %v79 = vunpack.c.l.b16 %v71
    %v80 = vunpack.c.l.b16 %v72
    %v81 = vunpack.c.l.b16 %v73
    %v82 = vpack.c.b16 %v79, %v78
    %v83 = vpack.c.b16 %v81, %v80
    %vm86 = vcmask 261120
    %v88 = vsel %vm86, %v69, 0
    %90 = vmatpush.bf16.msra.mxu0 0
    %91 = vmatpush.bf16.msra.mxu0 0
    %92 = vmatpush.bf16.msra.mxu0 0
    %93 = vmatpush.bf16.msra.mxu0 0
    %94 = vmatpush.bf16.msra.mxu0 0
    %95 = vmatpush.bf16.msra.mxu0 0
    %96 = vmatpush.bf16.msra.mxu0 %v83
    %97 = vmatpush.bf16.msra.mxu0 %v82
    %98 = vmatmul.bf16.gmra.mxu0 %v88
    %v99 = vpop.f32.mrf.mxu0
    %v100 = vadd.f32 0.0, %v99
    %v101 = vpop.f32.mrf.mxu0
    %102 = vdwg.mxu0
    %103 = vst [vmem:[#allocation8] sm:$0xff] %v100
    // Predicated region
    $region22: #{tpu_custom_call.1} parent=1 // pred_check
      _
    $region23: #{tpu_custom_call.1} parent=1 // pred_check_branch
      %105 = sbr.rel (0) target = $region25
    $region24: #{tpu_custom_call.1} parent=1 // pred_region
      %107 = vsyncadd [#allocation5], 0
      %s109 = sshll.u32 [#allocation8], 4
      %s110 = int_to_ptr.vmem [resolvable:$true] %s109
      %s111 = sshll.u32 %s2, 4
      %s112 = int_to_ptr.hbm [resolvable:$true] %s111
      %114 = dma.vmem_to_hbm [thread:$0]  %s110, 128, %s112, [#allocation5]
    $region25: #{tpu_custom_call.1} parent=1 // pred_fallthru
      _
    // Predicated region
    $region26: #{tpu_custom_call.1} parent=1 // pred_check
      _
    $region27: #{tpu_custom_call.1} parent=1 // pred_check_branch
      %116 = sbr.rel (0) target = $region29
    $region28: #{tpu_custom_call.1} parent=1 // pred_region
      %118 = dma.done [#allocation5], 128
    $region29: #{tpu_custom_call.1} parent=1 // pred_fallthru
      _
    %119 = vsyncpa [#allocation4], 1
    %120 = vsyncpa [#allocation7], 1
    %121 = vsyncpa [#allocation5], 1

</llo_original>
